<compile_context>
chip_gen: v7x
topology: tpu7x:2x2x1
jax: 0.10.0
libtpu: 0.0.40
codegen_flags: <defaults>
</compile_context>

<pallas_src>
import math

import jax
import jax.numpy as jnp
from jax.experimental import pallas as pl
from jax.experimental.pallas import tpu as pltpu


def _round_up(x, m):
    return (x + m - 1) // m * m


def _sublane_granule(dtype):
    # 8 rows per sublane tile for 4-byte dtypes, 16 for 2-byte, 32 for 1-byte.
    itemsize = jnp.dtype(dtype).itemsize
    return max(8, 32 // max(itemsize, 1))


# ---------------------------------------------------------------------------
# Kernels
# ---------------------------------------------------------------------------

def _mm_single_k_kernel(has_bias):
    """Whole contraction fits one block: direct dot (+bias) store, no scratch."""
    if has_bias:
        def kernel(a_ref, b_ref, bias_ref, o_ref):
            acc = jnp.dot(a_ref[...], b_ref[...],
                          preferred_element_type=jnp.float32)
            o_ref[...] = (acc + bias_ref[...].astype(jnp.float32)).astype(o_ref.dtype)
    else:
        def kernel(a_ref, b_ref, o_ref):
            acc = jnp.dot(a_ref[...], b_ref[...],
                          preferred_element_type=jnp.float32)
            o_ref[...] = acc.astype(o_ref.dtype)
    return kernel


def _mm_multi_k_kernel(has_bias, tk, k_actual):
    """Grid (i, k): stream A tiles, B is VMEM-resident (full padded K),
    f32 accumulator scratch with pl.when init/finalize."""
    need_mask = (k_actual % tk) != 0  # static: only ragged K pays for masking

    def kernel(a_ref, b_ref, *rest):
        if has_bias:
            bias_ref, o_ref, acc_ref = rest
        else:
            o_ref, acc_ref = rest
        kk = pl.program_id(1)

        @pl.when(kk == 0)
        def _init():
            acc_ref[...] = jnp.zeros_like(acc_ref)

        a = a_ref[...]
        if need_mask:
            # Zero the out-of-bounds K tail of the last A block (its contents
            # are unspecified); B's padded rows are explicit zeros already.
            col = jax.lax.broadcasted_iota(jnp.int32, a.shape, 1)
            a = jnp.where(col + kk * tk < k_actual, a, jnp.zeros_like(a))

        start = pl.multiple_of(kk * tk, tk)
        b = b_ref[pl.ds(start, tk), :]          # slice the resident B block
        acc_ref[...] += jnp.dot(a, b, preferred_element_type=jnp.float32)

        @pl.when(kk == pl.num_programs(1) - 1)
        def _finalize():
            r = acc_ref[...]
            if has_bias:
                r = r + bias_ref[...].astype(jnp.float32)
            o_ref[...] = r.astype(o_ref.dtype)

    return kernel


# ---------------------------------------------------------------------------
# Tiled matmul (+ optional bias) wrapper
# ---------------------------------------------------------------------------

def _tiled_matmul_bias(a, b, bias=None, *, out_dtype=jnp.float32, tm=512, tk=512):
    """out = a @ b (+ bias).  a: [M, K] (streamed, never copied/padded),
    b: [K, N] (small, VMEM-resident), bias: [N] or None."""
    m, k = a.shape
    k2, n = b.shape
    assert k == k2
    if bias is not None:
        assert bias.shape == (n,)

    granule = _sublane_granule(a.dtype)
    tm = min(tm, _round_up(m, granule))
    tm = _round_up(tm, granule)

    has_bias = bias is not None
    bias2d = None if bias is None else bias.reshape(1, n)

    if k <= tk:
        # --- single contraction block: overhead-minimal specialized kernel ---
        grid = (pl.cdiv(m, tm),)
        in_specs = [
            pl.BlockSpec((tm, k), lambda i: (i, 0)),
            pl.BlockSpec((k, n), lambda i: (0, 0)),      # resident, fetched once
        ]
        args = [a, b]
        if has_bias:
            in_specs.append(pl.BlockSpec((1, n), lambda i: (0, 0)))
            args.append(bias2d)
        return pl.pallas_call(
            _mm_single_k_kernel(has_bias),
            out_shape=jax.ShapeDtypeStruct((m, n), out_dtype),
            grid_spec=pltpu.PrefetchScalarGridSpec(
                num_scalar_prefetch=0,
                grid=grid,
                in_specs=in_specs,
                out_specs=pl.BlockSpec((tm, n), lambda i: (i, 0)),
            ),
            compiler_params=pltpu.CompilerParams(
                dimension_semantics=("parallel",),
            ),
        )(*args)

    # --- multi-k: stream A (adj) once, hold B resident across the grid ------
    kp = _round_up(k, tk)
    if kp != k:
        # Pad only the SMALL operand's K dim (keeps the in-kernel dynamic
        # slice in bounds and guarantees zeros beyond the real K).
        b = jnp.pad(b, ((0, kp - k), (0, 0)))

    grid = (pl.cdiv(m, tm), kp // tk)
    in_specs = [
        pl.BlockSpec((tm, tk), lambda i, kk: (i, kk)),   # adj tile stream
        pl.BlockSpec((kp, n), lambda i, kk: (0, 0)),     # resident B (support)
    ]
    args = [a, b]
    if has_bias:
        in_specs.append(pl.BlockSpec((1, n), lambda i, kk: (0, 0)))
        args.append(bias2d)

    # VMEM budget check (important on v7x: 64 MiB physical / 32 MiB scoped).
    a_item = jnp.dtype(a.dtype).itemsize
    b_item = jnp.dtype(b.dtype).itemsize
    o_item = jnp.dtype(out_dtype).itemsize
    vmem_est = (2 * tm * tk * a_item          # double-buffered A tiles
                + 2 * kp * n * b_item         # resident B (worst case 2 bufs)
                + 2 * tm * n * o_item         # output tiles
                + tm * n * 4                  # f32 accumulator scratch
                + 2 * n * 4)                  # bias
    vmem_limit = None
    if vmem_est > 12 * (1 << 20):
        vmem_limit = int(min(vmem_est * 3 // 2, 64 * (1 << 20)))

    return pl.pallas_call(
        _mm_multi_k_kernel(has_bias, tk, k),
        out_shape=jax.ShapeDtypeStruct((m, n), out_dtype),
        grid_spec=pltpu.PrefetchScalarGridSpec(
            num_scalar_prefetch=0,
            grid=grid,
            in_specs=in_specs,
            out_specs=pl.BlockSpec((tm, n), lambda i, kk: (i, 0)),
            scratch_shapes=[pltpu.VMEM((tm, n), jnp.float32)],
        ),
        compiler_params=pltpu.CompilerParams(
            dimension_semantics=("parallel", "arbitrary"),
            vmem_limit_bytes=vmem_limit,
        ),
    )(*args)


# ---------------------------------------------------------------------------
# GraphConvolution forward
# ---------------------------------------------------------------------------

def graph_convolution(x, adj, weight, bias, *, compute_dtype=None):
    """adj @ (x @ weight) + bias  (same semantics as the PyTorch module).

    compute_dtype=jnp.bfloat16 halves the HBM-bound adj stream and hits the
    bf16 MXU rate (f32 accumulation kept); the intermediate is then rounded
    to bf16 between the two matmuls (documented double rounding)."""
    n, f_in = x.shape
    f_out = weight.shape[1]
    assert adj.shape == (n, n)
    assert weight.shape == (f_in, f_out)
    assert bias.shape == (f_out,)

    if compute_dtype is not None:
        x = x.astype(compute_dtype)
        adj = adj.astype(compute_dtype)
        weight = weight.astype(compute_dtype)

    # Reassociate so the dominant N x N contraction multiplies the smaller
    # feature dim.  Mathematically identical up to f32 rounding.
    if f_out <= f_in:
        support = _tiled_matmul_bias(x, weight, None, out_dtype=x.dtype)
        return _tiled_matmul_bias(adj, support, bias, out_dtype=jnp.float32)
    else:
        agg = _tiled_matmul_bias(adj, x, None, out_dtype=x.dtype)
        return _tiled_matmul_bias(agg, weight, bias, out_dtype=jnp.float32)


def init_params(key, in_features, out_features):
    """Mirror the PyTorch module: kaiming_uniform_(weight) (a=0, fan_in mode;
    fan_in of a [in, out] 2-D tensor is dim 1 == out_features), zeros bias."""
    bound = math.sqrt(6.0 / out_features)
    weight = jax.random.uniform(
        key, (in_features, out_features), jnp.float32, -bound, bound
    )
    bias = jnp.zeros((out_features,), jnp.float32)
    return weight, bias


if __name__ == "__main__":
    key = jax.random.PRNGKey(0)
    keys = jax.random.split(key, 10)
    HI = jax.lax.Precision.HIGHEST

    def make_adj(k, n):
        a = jax.random.uniform(k, (n, n), jnp.float32)
        a = (a + a.T) * 0.5 + jnp.eye(n, dtype=jnp.float32)
        return a / jnp.sum(a, axis=1, keepdims=True)

    def ref_gcn(x, adj, w, b):
        return jnp.matmul(adj, jnp.matmul(x, w, precision=HI), precision=HI) + b

    # 1) small demo at module-like sizes (F_in < F_out -> (adj @ x) @ W path)
    N, F_IN, F_OUT = 16, 32, 64
    x = jax.random.normal(keys[0], (N, F_IN), jnp.float32)
    adj = make_adj(keys[1], N)
    weight, bias = init_params(keys[2], F_IN, F_OUT)
    out = jax.block_until_ready(graph_convolution(x, adj, weight, bias))
    ref = ref_gcn(x, adj, weight, bias)
    assert out.shape == (N, F_OUT)
    assert jnp.allclose(out, ref, rtol=2e-3, atol=2e-3)

    # 2) other ordering (F_out <= F_in -> adj @ (x @ W) path)
    weight2, bias2 = init_params(keys[3], F_OUT, F_IN)
    out2 = jax.block_until_ready(graph_convolution(ref, adj, weight2, bias2))
    ref2 = ref_gcn(ref, adj, weight2, bias2)
    assert out2.shape == (N, F_IN)
    assert jnp.allclose(out2, ref2, rtol=2e-3, atol=2e-3)

    # 3) bf16 MXU inputs (f32 accumulation), as recommended for v6e/v7x
    out_bf16 = jax.block_until_ready(
        graph_convolution(x, adj, weight, bias, compute_dtype=jnp.bfloat16))
    assert out_bf16.shape == (N, F_OUT)
    assert bool(jnp.all(jnp.isfinite(out_bf16)))
    assert jnp.allclose(out_bf16.astype(jnp.float32), ref, rtol=1e-1, atol=1e-1)

    # 4) larger graph: multi-block grid with k-axis accumulation (aligned N)
    N3, F_IN3, F_OUT3 = 1024, 64, 128
    x3 = jax.random.normal(keys[4], (N3, F_IN3), jnp.float32)
    adj3 = make_adj(keys[5], N3)
    weight3, bias3 = init_params(keys[6], F_IN3, F_OUT3)
    out3 = jax.block_until_ready(graph_convolution(x3, adj3, weight3, bias3))
    ref3 = ref_gcn(x3, adj3, weight3, bias3)
    assert out3.shape == (N3, F_OUT3)
    assert jnp.allclose(out3, ref3, rtol=2e-3, atol=2e-3)

    # 5) ragged graph: N not a tile multiple -> partial row blocks + in-kernel
    #    K-tail masking on the multi-k (bias) matmul, no adj padding/copies.
    N4, F_IN4, F_OUT4 = 600, 96, 48
    x4 = jax.random.normal(keys[7], (N4, F_IN4), jnp.float32)
    adj4 = make_adj(keys[8], N4)
    weight4, bias4 = init_params(keys[9], F_IN4, F_OUT4)
    out4 = jax.block_until_ready(graph_convolution(x4, adj4, weight4, bias4))
    ref4 = ref_gcn(x4, adj4, weight4, bias4)
    assert out4.shape == (N4, F_OUT4)
    assert jnp.allclose(out4, ref4, rtol=2e-3, atol=2e-3)

    print("KERNEL_OK")
</pallas_src>

<mosaic_0001>
module attributes {stable_mosaic.version = 11 : i64} {
  func.func @kernel(%arg0: i32, %arg1: memref<16x16xf32, #tpu.memory_space<vmem>>, %arg2: memref<16x32xf32, #tpu.memory_space<vmem>>, %arg3: memref<16x32xf32, #tpu.memory_space<vmem>>) attributes {dimension_semantics = [#tpu.dimension_semantics<parallel>], iteration_bounds = array<i64: 1>, scalar_prefetch = 0 : i64, scratch_operands = 0 : i64, tpu.core_type = #tpu.core_type<tc>, window_params = [{transform_indices = @transform_0, window_bounds = array<i64: 16, 16>}, {pipeline_mode = #tpu.pipeline_mode<synchronous>, transform_indices = @transform_1, window_bounds = array<i64: 16, 32>}, {transform_indices = @transform_2, window_bounds = array<i64: 16, 32>}]} {
    %c0 = arith.constant 0 : index
    %c0_0 = arith.constant 0 : index
    %0 = vector.load %arg1[%c0, %c0_0] : memref<16x16xf32, #tpu.memory_space<vmem>>, vector<16x16xf32>
    %c0_1 = arith.constant 0 : index
    %c0_2 = arith.constant 0 : index
    %1 = vector.load %arg2[%c0_1, %c0_2] : memref<16x32xf32, #tpu.memory_space<vmem>>, vector<16x32xf32>
    %cst = arith.constant dense<0.000000e+00> : vector<16x32xf32>
    %2 = tpu.matmul %0, %1, %cst {dimension_numbers = #tpu.dot_dimension_numbers<[1], [0], [0], [1], [0, 0, 1, 1], [], []>} : vector<16x16xf32>, vector<16x32xf32>, vector<16x32xf32> -> vector<16x32xf32>
    %c0_3 = arith.constant 0 : index
    %c0_4 = arith.constant 0 : index
    %3 = vector.load %arg3[%c0_3, %c0_4] : memref<16x32xf32, #tpu.memory_space<vmem>>, vector<16x32xf32>
    tpu.vector_store %arg3[%c0_3, %c0_4], %2 {strides = array<i32>} : memref<16x32xf32, #tpu.memory_space<vmem>>, vector<16x32xf32>,
    return
  }
  func.func @transform_0(%arg0: i32) -> (i32, i32) {
    %c0_i32 = arith.constant 0 : i32
    %c0_i32_0 = arith.constant 0 : i32
    return %arg0, %c0_i32 : i32, i32
  }
  func.func @transform_1(%arg0: i32) -> (i32, i32) {
    %c0_i32 = arith.constant 0 : i32
    %c0_i32_0 = arith.constant 0 : i32
    %c0_i32_1 = arith.constant 0 : i32
    return %c0_i32, %c0_i32_0 : i32, i32
  }
  func.func @transform_2(%arg0: i32) -> (i32, i32) {
    %c0_i32 = arith.constant 0 : i32
    %c0_i32_0 = arith.constant 0 : i32
    return %arg0, %c0_i32 : i32, i32
  }
}

</mosaic_0001>

<llo_original>
// kernel: tpu_custom_call.1
$region0: #{tpu_custom_call.1}
  #allocation0 [shape = 'u32[]', space=smem, size = 0x4, offset = 0x4, fixed_abs, tag = 'smem constant byte address 0x4 - core index']
  #allocation1 [shape = 'u32[144,128]{1,0:T(1,128)}', space=vmem, size = 0x12000, scoped, tag = 'internal scratch']
  %s0 = inlined_call_operand.hbm [shape: f32[16,16], index: 0, kind: input, shape index: {}]
  %s1 = inlined_call_operand.hbm [shape: f32[16,32], index: 1, kind: input, shape index: {}]
  %s2 = inlined_call_operand.hbm [shape: f32[16,32], index: 2, kind: output, shape index: {}]
  %s3 = sld [smem:[#allocation0]]
  $region26: #{tpu_custom_call.1} parent=0
    _
  %s5 = ssub.s32 1, %s3
  %s6 = scalar_select 0, %s5, %s3
  $region1: #{tpu_custom_call.1} parent=0
    #allocation2 [shape = 'u8[8192]{0}', space=vmem, size = 0x2000, scoped, tag = 'input window, operand 0, single buffered']
    #allocation3 [shape = 's32[1]{0}', space=sflag, size = 0x4, scoped, tag = 'scoped memory for tpu_custom_call.1']
    #allocation4 [shape = 's32[1]{0}', space=sflag, size = 0x4, scoped, tag = 'scoped memory for tpu_custom_call.1']
    #allocation5 [shape = 'u8[8192]{0}', space=vmem, size = 0x2000, scoped, tag = 'input window, operand 1, single buffered']
    #allocation6 [shape = 's32[1]{0}', space=sflag, size = 0x4, scoped, tag = 'scoped memory for tpu_custom_call.1']
    #allocation7 [shape = 'u8[8192]{0}', space=vmem, size = 0x2000, scoped, tag = 'output window, operand 0, single buffered']
    %7 = vsyncpa [#allocation3], 0
    %8 = vsyncpa [#allocation6], 0
    %9 = vsyncpa [#allocation4], 0
    // Predicated region
    $region2: #{tpu_custom_call.1} parent=1 // pred_check
      _
    $region3: #{tpu_custom_call.1} parent=1 // pred_check_branch
      %11 = sbr.rel (0) target = $region5
    $region4: #{tpu_custom_call.1} parent=1 // pred_region
      %s13 = ssub.s32 256, 256
      %14 = vsyncadd [#allocation3], %s13
      %s15 = sshll.u32 [#allocation2], 4
      %s16 = int_to_ptr.vmem [resolvable:$true] %s15
      %21 = dma.hbm_to_vmem [thread:$0]  %s0, 256, %s16, [#allocation3], 128, 128, 8
    $region5: #{tpu_custom_call.1} parent=1 // pred_fallthru
      _
    // Predicated region
    $region6: #{tpu_custom_call.1} parent=1 // pred_check
      _
    $region7: #{tpu_custom_call.1} parent=1 // pred_check_branch
      %23 = sbr.rel (0) target = $region9
    $region8: #{tpu_custom_call.1} parent=1 // pred_region
      %s25 = ssub.s32 256, 256
      %26 = vsyncadd [#allocation6], %s25
      %s27 = sshll.u32 [#allocation5], 4
      %s28 = int_to_ptr.vmem [resolvable:$true] %s27
      %33 = dma.hbm_to_vmem [thread:$0]  %s1, 256, %s28, [#allocation6], 128, 128, 8
    $region9: #{tpu_custom_call.1} parent=1 // pred_fallthru
      _
    // Predicated region
    $region10: #{tpu_custom_call.1} parent=1 // pred_check
      _
    $region11: #{tpu_custom_call.1} parent=1 // pred_check_branch
      %35 = sbr.rel (0) target = $region13
    $region12: #{tpu_custom_call.1} parent=1 // pred_region
      %36 = dma.done [#allocation3], 256
    $region13: #{tpu_custom_call.1} parent=1 // pred_fallthru
      _
    // Predicated region
    $region14: #{tpu_custom_call.1} parent=1 // pred_check
      _
    $region15: #{tpu_custom_call.1} parent=1 // pred_check_branch
      %38 = sbr.rel (0) target = $region17
    $region16: #{tpu_custom_call.1} parent=1 // pred_region
      %39 = dma.done [#allocation6], 256
    $region17: #{tpu_custom_call.1} parent=1 // pred_fallthru
      _
    %v40 = vld [vmem:[#allocation2] sm:$0xff]
    %v41 = vld [vmem:[#allocation2 + $0x8] sm:$0xff]
    %v42 = vld [vmem:[#allocation5] sm:$0xff]
    %v43 = vld [vmem:[#allocation5 + $0x8] sm:$0xff]
    %vm44 = vcmask 130048
    %v46 = vsel %vm44, %v40, 0
    %v49 = vsel %vm44, %v41, 0
    %51 = vmatprep.subr.mxu0 0.0
    %52 = vmatpush1.msra.mxu0 %v42
    %53 = vmatprep.subr.mxu0 0.0
    %54 = vmatpush1.msra.mxu0 %v43
    %55 = vmatprep.subr.mxu0 0.0
    %56 = vmatpush1.msra.mxu0 0.0
    %57 = vmatprep.subr.mxu0 0.0
    %58 = vmatpush1.msra.mxu0 0.0
    %59 = vmatprep.subr.mxu0 0.0
    %60 = vmatpush1.msra.mxu0 0.0
    %61 = vmatprep.subr.mxu0 0.0
    %62 = vmatpush1.msra.mxu0 0.0
    %63 = vmatprep.subr.mxu0 0.0
    %64 = vmatpush1.msra.mxu0 0.0
    %65 = vmatprep.subr.mxu0 0.0
    %66 = vmatpush1.msra.mxu0 0.0
    %67 = vmatprep.subr.mxu0 0.0
    %68 = vmatpush1.msra.mxu0 0.0
    %69 = vmatprep.subr.mxu0 0.0
    %70 = vmatpush1.msra.mxu0 0.0
    %71 = vmatprep.subr.mxu0 0.0
    %72 = vmatpush1.msra.mxu0 0.0
    %73 = vmatprep.subr.mxu0 0.0
    %74 = vmatpush1.msra.mxu0 0.0
    %75 = vmatprep.subr.mxu0 0.0
    %76 = vmatpush1.msra.mxu0 0.0
    %77 = vmatprep.subr.mxu0 0.0
    %78 = vmatpush1.msra.mxu0 0.0
    %79 = vmatprep.subr.mxu0 0.0
    %80 = vmatpush1.msra.mxu0 0.0
    %81 = vmatprep.subr.mxu0 0.0
    %82 = vmatpush1.msra.mxu0 0.0
    %83 = vmatprep.subr.mxu0 0.0
    %84 = vmatpush1.msra.mxu0 0.0
    %85 = vmatprep.subr.mxu0 0.0
    %86 = vmatpush1.msra.mxu0 0.0
    %87 = vmatprep.subr.mxu0 0.0
    %88 = vmatpush1.msra.mxu0 0.0
    %89 = vmatprep.subr.mxu0 0.0
    %90 = vmatpush1.msra.mxu0 0.0
    %91 = vmatprep.subr.mxu0 0.0
    %92 = vmatpush1.msra.mxu0 0.0
    %93 = vmatprep.subr.mxu0 0.0
    %94 = vmatpush1.msra.mxu0 0.0
    %95 = vmatprep.subr.mxu0 0.0
    %96 = vmatpush1.msra.mxu0 0.0
    %97 = vmatprep.subr.mxu0 0.0
    %98 = vmatpush1.msra.mxu0 0.0
    %99 = vmatprep.subr.mxu0 0.0
    %100 = vmatpush1.msra.mxu0 0.0
    %101 = vmatprep.subr.mxu0 0.0
    %102 = vmatpush1.msra.mxu0 0.0
    %103 = vmatprep.subr.mxu0 0.0
    %104 = vmatpush1.msra.mxu0 0.0
    %105 = vmatprep.subr.mxu0 0.0
    %106 = vmatpush1.msra.mxu0 0.0
    %107 = vmatprep.subr.mxu0 0.0
    %108 = vmatpush1.msra.mxu0 0.0
    %109 = vmatprep.subr.mxu0 0.0
    %110 = vmatpush1.msra.mxu0 0.0
    %111 = vmatprep.subr.mxu0 0.0
    %112 = vmatpush1.msra.mxu0 0.0
    %113 = vmatprep.subr.mxu0 0.0
    %114 = vmatpush1.msra.mxu0 0.0
    %115 = vmatprep.mubr.f32.mxu0 0.0
    %116 = vmatmul.mubr.f32.gmra.mrb[0].mxu0 %v46
    %v117 = vpop.f32.mrb[0].mxu0
    %v118 = vadd.f32 0.0, %v117
    %v119 = vpop.f32.mrb[0].mxu0
    %120 = vmatprep.mubr.f32.mxu0 0.0
    %121 = vmatmul.mubr.f32.gmra.mrb[0].mxu0 %v49
    %v122 = vpop.f32.mrb[0].mxu0
    %v123 = vadd.f32 0.0, %v122
    %v124 = vpop.f32.mrb[0].mxu0
    %125 = vdwg.mxu0
    %vm126 = vcmask 261120
    %127 = vst.msk [vmem:[#allocation7] sm:$0xff] %vm126, %v118
    %128 = vst.msk [vmem:[#allocation7 + $0x8] sm:$0xff] %vm126, %v123
    // Predicated region
    $region18: #{tpu_custom_call.1} parent=1 // pred_check
      _
    $region19: #{tpu_custom_call.1} parent=1 // pred_check_branch
      %130 = sbr.rel (0) target = $region21
    $region20: #{tpu_custom_call.1} parent=1 // pred_region
      %s132 = ssub.s32 256, 256
      %133 = vsyncadd [#allocation4], %s132
      %s134 = sshll.u32 [#allocation7], 4
      %s135 = int_to_ptr.vmem [resolvable:$true] %s134
      %140 = dma.vmem_to_hbm [thread:$0]  %s135, 256, %s2, [#allocation4], 128, 128, 8
    $region21: #{tpu_custom_call.1} parent=1 // pred_fallthru
      _
    // Predicated region
    $region22: #{tpu_custom_call.1} parent=1 // pred_check
      _
    $region23: #{tpu_custom_call.1} parent=1 // pred_check_branch
      %142 = sbr.rel (0) target = $region25
    $region24: #{tpu_custom_call.1} parent=1 // pred_region
      %143 = dma.done [#allocation4], 256
    $region25: #{tpu_custom_call.1} parent=1 // pred_fallthru
      _
    %144 = vsyncpa [#allocation3], 1
    %145 = vsyncpa [#allocation6], 1
    %146 = vsyncpa [#allocation4], 1

</llo_original>
